<compile_context>
chip_gen: v6e
topology: v6e:2x2x1
jax: 0.10.0
libtpu: 0.0.40
codegen_flags: <defaults>
</compile_context>

<pallas_src>
import functools

import jax
import jax.numpy as jnp
import numpy as np
from jax import lax
from jax.experimental import pallas as pl
from jax.experimental.pallas import tpu as pltpu

# ----------------- hyperparams consistent with the module (demo-sized) -----------------
IN_CHANS = 32      # module default 512 (reduced for a small demo)
EMBED_DIM = 32     # module default 768 (reduced for a small demo)
KERNEL = 10        # module default
STRIDE = 2         # module default
PAD = 3            # module default
POS_OUT = 16       # Conv1d(3 -> 16, kernel_size=1)

# Tile caps for the proj matmul (review: >=256 output tile, tk up to 2048).
TM_CAP = 256
TN_CAP = 256       # v5e could keep 128 (4x128-wide MXU); 256 matches v6e/v7x.
TK_CAP = 2048


def _round_up(x, m):
    return ((x + m - 1) // m) * m


def _cdiv(a, b):
    return -(-a // b)


def _plan_proj_tiles(K, E):
    """Static tile plan for the (M,K)x(K,E) proj matmul, shared by the one-time
    weight prep and the per-call launch so all paddings agree."""
    tn = min(TN_CAP, _round_up(E, 128))
    En = _round_up(E, tn)
    Kn = _round_up(K, 128)
    # Largest 128-multiple <= TK_CAP that divides the 128-aligned K, so there
    # is never extra K padding (and no per-call K-pad copy of the activations).
    # Production K=51200 -> tk=2048; demo K=3200 -> tk=640.
    tk = 128
    for t in range(128, min(TK_CAP, Kn) + 1, 128):
        if Kn % t == 0:
            tk = t
    return tn, En, tk, Kn


def _vmem_limit_bytes():
    """Scoped-VMEM budget derived from the chip (v7x: 64 MiB physical per TC,
    v5e/v6e: 128 MiB) instead of a hard constant; keep ~30% pipeline headroom."""
    cap = 64 * 1024 * 1024          # conservative fallback = v7x physical VMEM
    try:
        cap = int(pltpu.get_tpu_info().vmem_capacity_bytes)
    except Exception:
        pass
    return max(32 * 1024 * 1024, min(int(cap * 0.7), 96 * 1024 * 1024))


# --------------------- Pallas kernel: proj conv as tiled MXU matmul --------------
def _proj_matmul_kernel(p_ref, w_ref, b_ref, o_ref, acc_ref):
    # p_ref: (tm, tk) bf16   w_ref: (tk, tn) bf16   b_ref: (1, tn) f32
    # o_ref: (tm, tn) bf16   acc_ref: (tm, tn) f32 scratch, resident across K
    k = pl.program_id(2)

    @pl.when(k == 0)
    def _init():
        # Bias folded into the accumulator init -> epilogue is pure cast+store.
        acc_ref[...] = jnp.broadcast_to(b_ref[...], acc_ref.shape)

    acc_ref[...] += jnp.dot(p_ref[...], w_ref[...],
                            preferred_element_type=jnp.float32)

    @pl.when(k == pl.num_programs(2) - 1)
    def _finalize():
        # Single bf16 HBM writeback per (i, j) tile, off the per-K-step path.
        o_ref[...] = acc_ref[...].astype(o_ref.dtype)


def proj_matmul(patches, w_kn, b_1n, E):
    """out[:M, :E] = patches @ w_kn[:K, :E] + bias, tiled for TPU.

    patches: (M, K) bf16,  w_kn: (Kn, En) bf16 (pre-padded at load time),
    b_1n: (1, En) f32  ->  (M, E) bf16.
    bf16 operands on the MXU, f32 accumulation in VMEM; K is streamed
    HBM->VMEM so the same kernel scales to production shapes (K=51200, E=768)
    within v7x's 64 MiB VMEM.  M/E/K are tile multiples -> lane-dense stores.
    """
    M, K = patches.shape
    Kn, En = w_kn.shape
    tn, En2, tk, Kn2 = _plan_proj_tiles(K, E)
    assert (Kn, En) == (Kn2, En2), ((Kn, En), (Kn2, En2))

    n_j = En // tn
    tm = min(TM_CAP, _round_up(M, 8))
    # v7x megacore: two TensorCores -> keep at least 2 "parallel" output tiles
    # when the problem would otherwise collapse to a (1, 1, K) grid.
    if n_j * _cdiv(M, tm) < 2 and M > 8:
        tm = _round_up(_cdiv(M, 2), 8)
    Mn = _round_up(M, tm)
    n_i = Mn // tm

    p = patches.astype(jnp.bfloat16)
    if (Mn, Kn) != (M, K):
        # Only the small M pad remains (K is 128-aligned and tk | Kn by plan).
        p = jnp.pad(p, ((0, Mn - M), (0, Kn - K)))

    grid = (n_i, n_j, Kn // tk)

    out = pl.pallas_call(
        _proj_matmul_kernel,
        out_shape=jax.ShapeDtypeStruct((Mn, En), jnp.bfloat16),
        grid_spec=pltpu.PrefetchScalarGridSpec(
            num_scalar_prefetch=0,
            grid=grid,
            in_specs=[
                pl.BlockSpec((tm, tk), lambda i, j, k: (i, k)),   # activations
                pl.BlockSpec((tk, tn), lambda i, j, k: (k, j)),   # weights
                pl.BlockSpec((1, tn), lambda i, j, k: (0, j)),    # bias
            ],
            out_specs=pl.BlockSpec((tm, tn), lambda i, j, k: (i, j)),
            scratch_shapes=[pltpu.VMEM((tm, tn), jnp.float32)],
        ),
        compiler_params=pltpu.CompilerParams(
            # M/E parallel (megacore sharding), K last + arbitrary (reduction).
            dimension_semantics=("parallel", "parallel", "arbitrary"),
            vmem_limit_bytes=_vmem_limit_bytes(),
        ),
        cost_estimate=pl.CostEstimate(
            flops=2 * Mn * Kn * En,
            transcendentals=0,
            # Real re-read factors: activations re-read per j-tile, weights
            # (+bias) re-read per i-tile, one bf16 writeback.
            bytes_accessed=(Mn * Kn * 2) * n_j
                           + (Kn * En * 2 + En * 4) * n_i
                           + Mn * En * 2,
        ),
    )(p, w_kn, b_1n)
    return out[:M, :E]


def prepare_proj_params(proj_w, proj_b):
    """One-time (load-time) weight layout for the proj matmul: OIHW -> (K, E)
    -> padded bf16 (Kn, En); bias -> padded f32 (1, En).  Hoisted out of the
    forward so the 2*K*E-byte transpose+cast+pad copy never runs per call."""
    E, Cin, kh, kw = proj_w.shape
    K = Cin * kh * kw
    _, En, _, Kn = _plan_proj_tiles(K, E)
    w = jnp.pad(proj_w.reshape(E, K).T.astype(jnp.bfloat16),
                ((0, Kn - K), (0, En - E)))
    b = jnp.pad(proj_b.astype(jnp.float32).reshape(1, E), ((0, 0), (0, En - E)))
    return jax.block_until_ready(w), jax.block_until_ready(b)


# --------------------- JAX glue: fused, copy-free patch extraction ------------
def extract_patches(x, k, s, pad):
    """x: (B, Cin, H, W) -> (B*Hout*Wout, Cin*k*k), feature order (Cin, kh, kw).

    Single fused lax.conv_general_dilated_patches with an NHWC output spec so
    the feature dim is already last (copy-free collapse to (M, K), no
    transpose).  It is an identity-weight gather, so default precision is
    exact and the bf16 input dtype flows straight through.
    """
    B, Cin, H, W = x.shape
    p = lax.conv_general_dilated_patches(
        x, filter_shape=(k, k), window_strides=(s, s),
        padding=[(pad, pad), (pad, pad)],
        dimension_numbers=("NCHW", "OIHW", "NHWC"))    # (B, Hout, Wout, Cin*k*k)
    _, Hout, Wout, CKK = p.shape
    assert CKK == Cin * k * k, (CKK, Cin, k)
    return p.reshape(B * Hout * Wout, CKK), Hout, Wout


# ------------------------------ full forward pass --------------------------------
@functools.partial(jax.jit, static_argnames=("in_chans", "flatten"))
def patch_embed_event_tmp(x, params, in_chans=IN_CHANS, flatten=True):
    """Forward of PatchEmbed_event_TMP.  x: (B, 1, C_tok, L)."""
    x = x.astype(jnp.float32)                                 # .type(FloatTensor)
    xs = jnp.squeeze(x, axis=1)                               # (B, C_tok, L)
    # pos_embedding Conv1d(3->16, k=1) + ReLU: a few vregs of VPU work -> plain
    # einsum, fused by XLA into the following concat/reshape (no Pallas launch,
    # no (B,3,L)<->(3,B*L) layout round trips).
    xyz = jnp.maximum(
        jnp.einsum("oi,bil->bol", params["pos_w"], xs[:, :3, :],
                   precision="highest")
        + params["pos_b"][None, :, None], 0.0)                # (B, 16, L)
    xcat = jnp.concatenate([xyz, xs[:, 3:, :]], axis=1)       # (B, N, C)
    B, N, C = xcat.shape
    H = W = int(np.sqrt(N * C // in_chans))
    assert H * W * in_chans == N * C, (
        f"N*C={N * C} is not a perfect-square multiple of in_chans={in_chans}")
    # bf16 here so the patch gather emits MXU-ready bf16 directly (no extra
    # astype pass over the M*K patch matrix).
    x4 = xcat.reshape(B, in_chans, H, W).astype(jnp.bfloat16)  # NCHW
    patches, Hout, Wout = extract_patches(x4, KERNEL, STRIDE, PAD)
    y = proj_matmul(patches, params["proj_w_kn"], params["proj_b_1n"], EMBED_DIM)
    if flatten:
        y = y.reshape(B, Hout * Wout, EMBED_DIM)              # flatten(2).transpose(1,2)
    else:
        y = y.reshape(B, Hout, Wout, EMBED_DIM).transpose(0, 3, 1, 2)
    # self.norm is nn.Identity() (norm_layer=False): no-op.
    return y


# -------------------------------------- main --------------------------------------
if __name__ == "__main__":
    key = jax.random.PRNGKey(0)
    # C_tok=19: first 3 channels -> pos_embedding(16), remaining 16 kept.
    # After concat: N = 16 + 16 = 32, C = L = 256  =>  N*C = IN_CHANS*16*16.
    B, C_tok, L = 2, 19, 256
    k1, k2, k3, k4, k5 = jax.random.split(key, 5)
    x = jax.random.normal(k1, (B, 1, C_tok, L), dtype=jnp.float32)
    pos_w = jax.random.normal(k2, (POS_OUT, 3), jnp.float32) * 0.1
    pos_b = jax.random.normal(k3, (POS_OUT,), jnp.float32) * 0.1
    proj_w = jax.random.normal(k4, (EMBED_DIM, IN_CHANS, KERNEL, KERNEL), jnp.float32) * 0.02
    proj_b = jax.random.normal(k5, (EMBED_DIM,), jnp.float32) * 0.02

    # One-time weight layout (transpose/cast/pad) -- off the per-call path.
    w_kn, b_1n = prepare_proj_params(proj_w, proj_b)
    params = {"pos_w": pos_w, "pos_b": pos_b,
              "proj_w_kn": w_kn, "proj_b_1n": b_1n}

    out = jax.block_until_ready(patch_embed_event_tmp(x, params))

    # ---- pure-JAX f32 reference for a sanity check ----
    xs = jnp.squeeze(x, 1)
    xyz_ref = jnp.maximum(
        jnp.einsum("oi,bil->bol", pos_w, xs[:, :3, :], precision="highest")
        + pos_b[None, :, None], 0.0)
    xcat = jnp.concatenate([xyz_ref, xs[:, 3:, :]], axis=1)
    Bn, N, C = xcat.shape
    Hh = Ww = int(np.sqrt(N * C // IN_CHANS))
    x4 = xcat.reshape(Bn, IN_CHANS, Hh, Ww)
    yref = lax.conv_general_dilated(
        x4, proj_w, (STRIDE, STRIDE), [(PAD, PAD), (PAD, PAD)],
        dimension_numbers=("NCHW", "OIHW", "NCHW"), precision=lax.Precision.HIGHEST)
    yref = yref + proj_b[None, :, None, None]
    yref = yref.reshape(Bn, EMBED_DIM, -1).transpose(0, 2, 1)

    assert out.shape == yref.shape, (out.shape, yref.shape)
    # Tolerance admits bf16 MXU operands + bf16 writeback vs. the f32 reference.
    np.testing.assert_allclose(np.asarray(out.astype(jnp.float32)),
                               np.asarray(yref), rtol=3e-2, atol=3e-2)
    print("KERNEL_OK")
</pallas_src>

<mosaic_0001>
module attributes {stable_mosaic.version = 11 : i64} {
  func.func @_proj_matmul_kernel(%arg0: i32, %arg1: i32, %arg2: i32, %arg3: memref<56x640xbf16, #tpu.memory_space<vmem>>, %arg4: memref<640x128xbf16, #tpu.memory_space<vmem>>, %arg5: memref<1x128xf32, #tpu.memory_space<vmem>>, %arg6: memref<56x128xbf16, #tpu.memory_space<vmem>>, %arg7: memref<56x128xf32, #tpu.memory_space<vmem>>) attributes {dimension_semantics = [#tpu.dimension_semantics<parallel>, #tpu.dimension_semantics<parallel>, #tpu.dimension_semantics<arbitrary>], iteration_bounds = array<i64: 2, 1, 5>, scalar_prefetch = 0 : i64, scratch_operands = 1 : i64, tpu.core_type = #tpu.core_type<tc>, window_params = [{transform_indices = @transform_0, window_bounds = array<i64: 56, 640>}, {transform_indices = @transform_1, window_bounds = array<i64: 640, 128>}, {transform_indices = @transform_2, window_bounds = array<i64: 1, 128>}, {transform_indices = @transform_3, window_bounds = array<i64: 56, 128>}]} {
    %c0_i32 = arith.constant 0 : i32
    %0 = arith.cmpi eq, %arg2, %c0_i32 : i32
    %1 = arith.extui %0 : i1 to i32
    %c0_i32_0 = arith.constant 0 : i32
    %2 = arith.cmpi ne, %1, %c0_i32_0 : i32
    scf.if %2 {
      %c0_9 = arith.constant 0 : index
      %c0_10 = arith.constant 0 : index
      %12 = vector.load %arg5[%c0_9, %c0_10] : memref<1x128xf32, #tpu.memory_space<vmem>>, vector<1x128xf32>
      %13 = vector.shape_cast %12 : vector<1x128xf32> to vector<1x128xf32>
      %14 = vector.broadcast %13 : vector<1x128xf32> to vector<56x128xf32>
      %c0_11 = arith.constant 0 : index
      %c0_12 = arith.constant 0 : index
      %15 = vector.load %arg7[%c0_11, %c0_12] : memref<56x128xf32, #tpu.memory_space<vmem>>, vector<56x128xf32>
      tpu.vector_store %arg7[%c0_11, %c0_12], %14 {strides = array<i32>} : memref<56x128xf32, #tpu.memory_space<vmem>>, vector<56x128xf32>,
    } else {
    }
    %c0 = arith.constant 0 : index
    %c0_1 = arith.constant 0 : index
    %3 = vector.load %arg7[%c0, %c0_1] : memref<56x128xf32, #tpu.memory_space<vmem>>, vector<56x128xf32>
    %c0_2 = arith.constant 0 : index
    %c0_3 = arith.constant 0 : index
    %4 = vector.load %arg3[%c0_2, %c0_3] : memref<56x640xbf16, #tpu.memory_space<vmem>>, vector<56x640xbf16>
    %c0_4 = arith.constant 0 : index
    %c0_5 = arith.constant 0 : index
    %5 = vector.load %arg4[%c0_4, %c0_5] : memref<640x128xbf16, #tpu.memory_space<vmem>>, vector<640x128xbf16>
    %cst = arith.constant dense<0.000000e+00> : vector<56x128xf32>
    %6 = tpu.matmul %4, %5, %cst {dimension_numbers = #tpu.dot_dimension_numbers<[1], [0], [0], [1], [0, 0, 1, 1], [], []>} : vector<56x640xbf16>, vector<640x128xbf16>, vector<56x128xf32> -> vector<56x128xf32>
    %7 = arith.addf %3, %6 : vector<56x128xf32>
    %c0_6 = arith.constant 0 : index
    %c0_7 = arith.constant 0 : index
    %8 = vector.load %arg7[%c0_6, %c0_7] : memref<56x128xf32, #tpu.memory_space<vmem>>, vector<56x128xf32>
    tpu.vector_store %arg7[%c0_6, %c0_7], %7 {strides = array<i32>} : memref<56x128xf32, #tpu.memory_space<vmem>>, vector<56x128xf32>,
    %c4_i32 = arith.constant 4 : i32
    %9 = arith.cmpi eq, %arg2, %c4_i32 : i32
    %10 = arith.extui %9 : i1 to i32
    %c0_i32_8 = arith.constant 0 : i32
    %11 = arith.cmpi ne, %10, %c0_i32_8 : i32
    scf.if %11 {
      %c0_9 = arith.constant 0 : index
      %c0_10 = arith.constant 0 : index
      %12 = vector.load %arg7[%c0_9, %c0_10] : memref<56x128xf32, #tpu.memory_space<vmem>>, vector<56x128xf32>
      %13 = arith.truncf %12 : vector<56x128xf32> to vector<56x128xbf16>
      %c0_11 = arith.constant 0 : index
      %c0_12 = arith.constant 0 : index
      %14 = vector.load %arg6[%c0_11, %c0_12] : memref<56x128xbf16, #tpu.memory_space<vmem>>, vector<56x128xbf16>
      tpu.vector_store %arg6[%c0_11, %c0_12], %13 {strides = array<i32>} : memref<56x128xbf16, #tpu.memory_space<vmem>>, vector<56x128xbf16>,
    } else {
    }
    return
  }
  func.func @transform_0(%arg0: i32, %arg1: i32, %arg2: i32) -> (i32, i32) {
    %c0_i32 = arith.constant 0 : i32
    return %arg0, %arg2 : i32, i32
  }
  func.func @transform_1(%arg0: i32, %arg1: i32, %arg2: i32) -> (i32, i32) {
    %c0_i32 = arith.constant 0 : i32
    return %arg2, %arg1 : i32, i32
  }
  func.func @transform_2(%arg0: i32, %arg1: i32, %arg2: i32) -> (i32, i32) {
    %c0_i32 = arith.constant 0 : i32
    %c0_i32_0 = arith.constant 0 : i32
    return %c0_i32, %arg1 : i32, i32
  }
  func.func @transform_3(%arg0: i32, %arg1: i32, %arg2: i32) -> (i32, i32) {
    %c0_i32 = arith.constant 0 : i32
    return %arg0, %arg1 : i32, i32
  }
}

</mosaic_0001>

<llo_original>
// kernel: patch_embed_event_tmp.1
$region0: #{patch_embed_event_tmp.1}
  #allocation0 [shape = 'u32[]', space=smem, size = 0x4, offset = 0x4, fixed_abs, tag = 'smem constant byte address 0x4 - core index']
  #allocation1 [shape = 'u32[144,128]{1,0:T(1,128)}', space=vmem, size = 0x12000, scoped, tag = 'internal scratch']
  #allocation2 [shape = 'f32[56,128]{1,0:T(8,128)}', space=vmem, size = 0x7000, scoped, tag = 'scratch operand']
  %s0 = inlined_call_operand.vmem [shape: bf16[112,3200], index: 0, kind: input, shape index: {}]
  %s1 = inlined_call_operand.vmem [shape: bf16[3200,128], index: 1, kind: input, shape index: {}]
  %s2 = inlined_call_operand.vmem [shape: f32[1,128], index: 2, kind: input, shape index: {}]
  %s3 = inlined_call_operand.vmem [shape: bf16[112,128], index: 3, kind: output, shape index: {}]
  %s4 = sld [smem:[#allocation0]]
  $region79: #{patch_embed_event_tmp.1} parent=0
    _
  %s6 = ssub.s32 1, %s4
  %s7 = scalar_select 0, %s6, %s4
  $region1: #{patch_embed_event_tmp.1} parent=0
    #allocation3 [shape = 'u8[143360]{0}', space=vmem, size = 0x23000, scoped, tag = 'input window, operand 0']
    loop: start=0, step=1, limit=12
    $region2: #{patch_embed_event_tmp.1} parent=1 // loop_pre_header
      _
    $region3: #{patch_embed_event_tmp.1} parent=1 // loop_header
      %s9 = sphi 0, %s13
      %p10 = scmp.ge.s32.totalorder %s9, 12
      %s16 = sphi 0, %s35
      %s17 = sphi 0, %s31
      %s18 = sphi 0, %s27
      %s19 = sphi 0, %s16
      %s20 = sphi 0, %s17
      %s21 = sphi 0, %s18
      %s22 = sphi 0, %s19
      %s23 = sphi 0, %s20
      %s24 = sphi 0, %s21
      %s40 = sphi 0, %s42
      %s43 = sphi 0, %s40
      %s44 = sphi 0, %s43
      %s60 = sphi 0, %s44
      %s68 = sphi 0, %s70
      %s71 = sphi 0, %s68
      %s72 = sphi 0, %s71
      %s88 = sphi 0, %s72
      %s94 = sphi 0, %s96
      %s97 = sphi 0, %s94
      %s98 = sphi 0, %s97
      %s114 = sphi 0, %s98
      %s122 = sphi 0, %s124
      %s125 = sphi 0, %s122
      %s126 = sphi 0, %s125
      %s142 = sphi 0, %s126
    $region4: #{patch_embed_event_tmp.1} parent=1 // loop_header_branch
      %12 = sbr.rel (%p10) target = $region8
    $region5: #{patch_embed_event_tmp.1} parent=1 // loop_body
      %s14 = ssub.s32 %s9, 1
      %s15 = ssub.s32 %s9, 2
      %s25 = sadd.s32 1, %s18
      %p26 = scmp.ge.s32.totalorder %s25, 5
      %s27 = scalar_select %p26, 0, %s25
      %s28 = sadd.s32 1, %s17
      %s29 = scalar_select %p26, %s28, %s17
      %p30 = scmp.ge.s32.totalorder %s29, 1
      %s31 = scalar_select %p30, 0, %s29
      %s32 = sadd.s32 1, %s16
      %s33 = scalar_select %p30, %s32, %s16
      %p34 = scmp.ge.s32.totalorder %s33, 2
      %s35 = scalar_select %p34, 0, %s33
      %s36 = ssub.s32 %s16, %s35
      %s37 = ssub.s32 %s18, %s27
      %s38 = sor.u32 %s36, %s37
      %p39 = scmp.eq.s32.totalorder %s38, 0
      %s41 = sadd.s32 %s40, 1
      %s42 = scalar_select %p39, %s40, %s41
      %p45 = pneg %p39
      %p46 = scmp.eq.s32.totalorder %s9, 9
      %p47 = por %p45, %p46
      %p48 = scmp.ne.s32.totalorder %s40, %s43
      %p49 = scmp.eq.s32.totalorder %s9, 0
      %p50 = por %p48, %p49
      %p51 = scmp.ne.s32.totalorder %s40, %s43
      %p52 = scmp.eq.s32.totalorder %s14, 9
      %p53 = por %p51, %p52
      %p54 = scmp.ne.s32.totalorder %s43, %s44
      %p55 = scmp.eq.s32.totalorder %s14, 0
      %p56 = por %p54, %p55
      %p57 = scmp.ne.s32.totalorder %s43, %s44
      %p58 = scmp.eq.s32.totalorder %s15, 9
      %p59 = por %p57, %p58
      %p61 = scmp.ne.s32.totalorder %s44, %s60
      %p62 = scmp.eq.s32.totalorder %s15, 0
      %p63 = por %p61, %p62
      %s64 = ssub.s32 %s18, %s27
      %s65 = ssub.s32 %s17, %s31
      %s66 = sor.u32 %s64, %s65
      %p67 = scmp.eq.s32.totalorder %s66, 0
      %s69 = sadd.s32 %s68, 1
      %s70 = scalar_select %p67, %s68, %s69
      %p73 = pneg %p67
      %p74 = scmp.eq.s32.totalorder %s9, 9
      %p75 = por %p73, %p74
      %p76 = scmp.ne.s32.totalorder %s68, %s71
      %p77 = scmp.eq.s32.totalorder %s9, 0
      %p78 = por %p76, %p77
      %p79 = scmp.ne.s32.totalorder %s68, %s71
      %p80 = scmp.eq.s32.totalorder %s14, 9
      %p81 = por %p79, %p80
      %p82 = scmp.ne.s32.totalorder %s71, %s72
      %p83 = scmp.eq.s32.totalorder %s14, 0
      %p84 = por %p82, %p83
      %p85 = scmp.ne.s32.totalorder %s71, %s72
      %p86 = scmp.eq.s32.totalorder %s15, 9
      %p87 = por %p85, %p86
      %p89 = scmp.ne.s32.totalorder %s72, %s88
      %p90 = scmp.eq.s32.totalorder %s15, 0
      %p91 = por %p89, %p90
      %s92 = ssub.s32 %s17, %s31
      %p93 = scmp.eq.s32.totalorder %s92, 0
      %s95 = sadd.s32 %s94, 1
      %s96 = scalar_select %p93, %s94, %s95
      %p99 = pneg %p93
      %p100 = scmp.eq.s32.totalorder %s9, 9
      %p101 = por %p99, %p100
      %p102 = scmp.ne.s32.totalorder %s94, %s97
      %p103 = scmp.eq.s32.totalorder %s9, 0
      %p104 = por %p102, %p103
      %p105 = scmp.ne.s32.totalorder %s94, %s97
      %p106 = scmp.eq.s32.totalorder %s14, 9
      %p107 = por %p105, %p106
      %p108 = scmp.ne.s32.totalorder %s97, %s98
      %p109 = scmp.eq.s32.totalorder %s14, 0
      %p110 = por %p108, %p109
      %p111 = scmp.ne.s32.totalorder %s97, %s98
      %p112 = scmp.eq.s32.totalorder %s15, 9
      %p113 = por %p111, %p112
      %p115 = scmp.ne.s32.totalorder %s98, %s114
      %p116 = scmp.eq.s32.totalorder %s15, 0
      %p117 = por %p115, %p116
      %s118 = ssub.s32 %s16, %s35
      %s119 = ssub.s32 %s17, %s31
      %s120 = sor.u32 %s118, %s119
      %p121 = scmp.eq.s32.totalorder %s120, 0
      %s123 = sadd.s32 %s122, 1
      %s124 = scalar_select %p121, %s122, %s123
      %p127 = pneg %p121
      %p128 = scmp.eq.s32.totalorder %s9, 9
      %p129 = por %p127, %p128
      %p130 = scmp.ne.s32.totalorder %s122, %s125
      %p131 = scmp.eq.s32.totalorder %s9, 0
      %p132 = por %p130, %p131
      %p133 = scmp.ne.s32.totalorder %s122, %s125
      %p134 = scmp.eq.s32.totalorder %s14, 9
      %p135 = por %p133, %p134
      %p136 = scmp.ne.s32.totalorder %s125, %s126
      %p137 = scmp.eq.s32.totalorder %s14, 0
      %p138 = por %p136, %p137
      %p139 = scmp.ne.s32.totalorder %s125, %s126
      %p140 = scmp.eq.s32.totalorder %s15, 9
      %p141 = por %p139, %p140
      %p143 = scmp.ne.s32.totalorder %s126, %s142
      %p144 = scmp.eq.s32.totalorder %s15, 0
      %p145 = por %p143, %p144
      %p146 = scmp.le.s32.totalorder 1, %s9
      %p147 = scmp.lt.s32.totalorder %s9, 11
      %p148 = pnand %p146, %p147
      %p149 = pneg %p148
      // Predicated region
      $region9: #{patch_embed_event_tmp.1} parent=5 // pred_check
        _
      $region10: #{patch_embed_event_tmp.1} parent=5 // pred_check_branch
        %151 = sbr.rel (%p148) target = $region12
      $region11: #{patch_embed_event_tmp.1} parent=5 // pred_region
        %s152 = ssub.s32 %s9, 1
        // Predicated region
        $region13: #{patch_embed_event_tmp.1} parent=11 // pred_check
          %p153 = pneg %p110
        $region14: #{patch_embed_event_tmp.1} parent=11 // pred_check_branch
          %155 = sbr.rel (%p153) target = $region16
        $region15: #{patch_embed_event_tmp.1} parent=11 // pred_region
          %p156 = scmp.lt.s32.totalorder %s20, 0
          %s157 = scalar_select %p156, %s20, 0
          %s158 = scalar_lea.vmem %s2, %s157
        $region16: #{patch_embed_event_tmp.1} parent=11 // pred_fallthru
          _
      $region12: #{patch_embed_event_tmp.1} parent=5 // pred_fallthru
        _
      %p159 = scmp.lt.s32.totalorder %s9, 10
      // Predicated region
      $region17: #{patch_embed_event_tmp.1} parent=5 // pred_check
        %p160 = pneg %p159
      $region18: #{patch_embed_event_tmp.1} parent=5 // pred_check_branch
        %162 = sbr.rel (%p160) target = $region20
      $region19: #{patch_embed_event_tmp.1} parent=5 // pred_region
        // Predicated region
        $region21: #{patch_embed_event_tmp.1} parent=19 // pred_check
          %p163 = pneg %p50
        $region22: #{patch_embed_event_tmp.1} parent=19 // pred_check_branch
          %165 = sbr.rel (%p163) target = $region24
        $region23: #{patch_embed_event_tmp.1} parent=19 // pred_region
          %s166 = sand.u32 %s40, 1
          %s167 = sand.u32 %s40, 1
          %s168 = smul.addr %s167, 140
          %s169 = scalar_lea.vmem [#allocation3], %s168
          %s170 = smul.u32 7, %s16
          %s171 = smul.u32 5, %s18
          %s172 = smul.addr %s170, 25
          %s173 = sadd.s32 %s171, %s172
          %s174 = smul.addr %s173, 4
          %s175 = scalar_lea.vmem %s0, %s174
          // Predicated region
          $region25: #{patch_embed_event_tmp.1} parent=23 // pred_check
            _
          $region26: #{patch_embed_event_tmp.1} parent=23 // pred_check_branch
            %177 = sbr.rel (0) target = $region28
          $region27: #{patch_embed_event_tmp.1} parent=23 // pred_region
            // Predicated region
            $region29: #{patch_embed_event_tmp.1} parent=27 // pred_check
              _
            $region30: #{patch_embed_event_tmp.1} parent=27 // pred_check_branch
              %179 = sbr.rel (0) target = $region32
            $region31: #{patch_embed_event_tmp.1} parent=27 // pred_region
              %s180 = scalar_lea.vmem %s175, 16
              %s181 = scalar_lea.vmem %s169, 16 [#allocation3]
              loop: start=0, step=1, limit=1
              $region33: #{patch_embed_event_tmp.1} parent=31 // loop_pre_header
                _
              $region34: #{patch_embed_event_tmp.1} parent=31 // loop_header
                %s183 = sphi 0, %s187
                %p184 = scmp.ge.s32.totalorder %s183, 1
                %s188 = sphi %s175, %s175
                %s189 = sphi %s169, %s169
              $region35: #{patch_embed_event_tmp.1} parent=31 // loop_header_branch
                %186 = sbr.rel (%p184) target = $region39
              $region36: #{patch_embed_event_tmp.1} parent=31 // loop_body
                %v190 = vld [vmem:[%s188] sm:$0xff]
                %191 = vst [vmem:[%s189] sm:$0xff] %v190
                %v192 = vld [vmem:[%s188 + $0x8] sm:$0xff]
                %193 = vst [vmem:[%s189 + $0x8] sm:$0xff] %v192
                %v194 = vld [vmem:[%s188 + $0x64] sm:$0xff]
                %195 = vst [vmem:[%s189 + $0x14] sm:$0xff] %v194
                %v196 = vld [vmem:[%s188 + $0x6c] sm:$0xff]
                %197 = vst [vmem:[%s189 + $0x1c] sm:$0xff] %v196
                %v198 = vld [vmem:[%s188 + $0xc8] sm:$0xff]
                %199 = vst [vmem:[%s189 + $0x28] sm:$0xff] %v198
                %v200 = vld [vmem:[%s188 + $0xd0] sm:$0xff]
                %201 = vst [vmem:[%s189 + $0x30] sm:$0xff] %v200
                %v202 = vld [vmem:[%s188 + $0x12c] sm:$0xff]
                %203 = vst [vmem:[%s189 + $0x3c] sm:$0xff] %v202
                %v204 = vld [vmem:[%s188 + $0x134] sm:$0xff]
                %205 = vst [vmem:[%s189 + $0x44] sm:$0xff] %v204
                %v206 = vld [vmem:[%s188 + $0x190] sm:$0xff]
                %207 = vst [vmem:[%s189 + $0x50] sm:$0xff] %v206
                %v208 = vld [vmem:[%s188 + $0x198] sm:$0xff]
                %209 = vst [vmem:[%s189 + $0x58] sm:$0xff] %v208
                %v210 = vld [vmem:[%s188 + $0x1f4] sm:$0xff]
                %211 = vst [vmem:[%s189 + $0x64] sm:$0xff] %v210
                %v212 = vld [vmem:[%s188 + $0x1fc] sm:$0xff]
                %213 = vst [vmem:[%s189 + $0x6c] sm:$0xff] %v212
                %v214 = vld [vmem:[%s188 + $0x258] sm:$0xff]
                %215 = vst [vmem:[%s189 + $0x78] sm:$0xff] %v214
                %v216 = vld [vmem:[%s188 + $0x260] sm:$0xff]
                %217 = vst [vmem:[%s189 + $0x80] sm:$0xff] %v216
              $region37: #{patch_embed_event_tmp.1} parent=31 // loop_footer
                %s187 = sadd.s32 1, %s183
              $region38: #{patch_embed_event_tmp.1} parent=31 // loop_footer_branch
                %182 = sbr.rel target = $region34
              $region39: #{patch_embed_event_tmp.1} parent=31 // loop_exit
                _
              %s219 = ssub.s32 16, 1
              loop: start=0, step=1, limit=1
              $region40: #{patch_embed_event_tmp.1} parent=31 // loop_pre_header
                _
              $region41: #{patch_embed_event_tmp.1} parent=31 // loop_header
                %s221 = sphi 0, %s225
                %p222 = scmp.ge.s32.totalorder %s221, 1
                %s226 = sphi %s180, %s180
                %s227 = sphi %s181, %s181
              $region42: #{patch_embed_event_tmp.1} parent=31 // loop_header_branch
                %224 = sbr.rel (%p222) target = $region46
              $region43: #{patch_embed_event_tmp.1} parent=31 // loop_body
                %v228 = vld [vmem:[%s226] sm:%s219]
                %229 = vst [vmem:[%s227] sm:%s219] %v228
                %v230 = vld [vmem:[%s226 + $0x64] sm:%s219]
                %231 = vst [vmem:[%s227 + $0x14] sm:%s219] %v230
                %v232 = vld [vmem:[%s226 + $0xc8] sm:%s219]
                %233 = vst [vmem:[%s227 + $0x28] sm:%s219] %v232
                %v234 = vld [vmem:[%s226 + $0x12c] sm:%s219]
                %235 = vst [vmem:[%s227 + $0x3c] sm:%s219] %v234
                %v236 = vld [vmem:[%s226 + $0x190] sm:%s219]
                %237 = vst [vmem:[%s227 + $0x50] sm:%s219] %v236
                %v238 = vld [vmem:[%s226 + $0x1f4] sm:%s219]
                %239 = vst [vmem:[%s227 + $0x64] sm:%s219] %v238
                %v240 = vld [vmem:[%s226 + $0x258] sm:%s219]
                %241 = vst [vmem:[%s227 + $0x78] sm:%s219] %v240
              $region44: #{patch_embed_event_tmp.1} parent=31 // loop_footer
                %s225 = sadd.s32 1, %s221
              $region45: #{patch_embed_event_tmp.1} parent=31 // loop_footer_branch
                %220 = sbr.rel target = $region41
              $region46: #{patch_embed_event_tmp.1} parent=31 // loop_exit
                _
            $region32: #{patch_embed_event_tmp.1} parent=27 // pred_fallthru
              _
          $region28: #{patch_embed_event_tmp.1} parent=23 // pred_fallthru
            _
          %242 = vnop
        $region24: #{patch_embed_event_tmp.1} parent=19 // pred_fallthru
          _
        // Predicated region
        $region47: #{patch_embed_event_tmp.1} parent=19 // pred_check
          %p243 = pneg %p78
        $region48: #{patch_embed_event_tmp.1} parent=19 // pred_check_branch
          %245 = sbr.rel (%p243) target = $region50
        $region49: #{patch_embed_event_tmp.1} parent=19 // pred_region
          %s246 = smul.u32 80, %s18
          %p247 = scmp.lt.s32.totalorder %s246, 399
          %s248 = scalar_select %p247, %s246, 399
          %p249 = scmp.lt.s32.totalorder %s17, 0
          %s250 = scalar_select %p249, %s17, 0
          %s251 = sadd.s32 %s250, %s248
          %s252 = smul.addr %s251, 4
          %s253 = scalar_lea.vmem %s1, %s252
          %s254 = smul.u32 80, %s18
        $region50: #{patch_embed_event_tmp.1} parent=19 // pred_fallthru
          _
      $region20: #{patch_embed_event_tmp.1} parent=5 // pred_fallthru
        _
      %p255 = scmp.le.s32.totalorder 1, %s9
      %p256 = scmp.lt.s32.totalorder %s9, 11
      %p257 = pnand %p255, %p256
      %p258 = pneg %p257
      // Predicated region
      $region51: #{patch_embed_event_tmp.1} parent=5 // pred_check
        _
      $region52: #{patch_embed_event_tmp.1} parent=5 // pred_check_branch
        %260 = sbr.rel (%p257) target = $region54
      $region53: #{patch_embed_event_tmp.1} parent=5 // pred_region
        %s261 = ssub.s32 %s9, 1
        %s262 = sand.u32 %s43, 1
        %s263 = sand.u32 %s43, 1
        %s264 = smul.addr %s263, 140
        %s265 = scalar_lea.vmem [#allocation3], %s264
        // Predicated region
        $region55: #{patch_embed_event_tmp.1} parent=53 // pred_check
          %p266 = pneg %p56
        $region56: #{patch_embed_event_tmp.1} parent=53 // pred_check_branch
          %268 = sbr.rel (%p266) target = $region58
        $region57: #{patch_embed_event_tmp.1} parent=53 // pred_region
          _
        $region58: #{patch_embed_event_tmp.1} parent=53 // pred_fallthru
          _
        %s269 = sand.u32 %s43, 1
        %s270 = sand.u32 %s43, 1
        %s271 = smul.addr %s270, 140
        %s272 = scalar_lea.vmem [#allocation3], %s271
        %p273 = pneg %p56
        %p274 = pneg %p53
        %s275 = smul.u32 80, %s21
        %p276 = scmp.lt.s32.totalorder %s275, 399
        %s277 = scalar_select %p276, %s275, 399
        %p278 = scmp.lt.s32.totalorder %s20, 0
        %s279 = scalar_select %p278, %s20, 0
        %s280 = sadd.s32 %s279, %s277
        %s281 = smul.addr %s280, 4
        %s282 = scalar_lea.vmem %s1, %s281
        %p283 = pneg %p84
        %p284 = pneg %p81
        %p285 = scmp.lt.s32.totalorder %s20, 0
        %s286 = scalar_select %p285, %s20, 0
        %s287 = scalar_lea.vmem %s2, %s286
        %p288 = pneg %p110
        %p289 = pneg %p107
        %p290 = pneg %p138
        %p291 = pneg %p135
        %s292 = smul.u32 7, %s19
        %p293 = scmp.lt.s32.totalorder %s292, 13
        %s294 = scalar_select %p293, %s292, 13
        %p295 = scmp.lt.s32.totalorder %s20, 0
        %s296 = scalar_select %p295, %s20, 0
        %s297 = sadd.s32 %s296, %s294
        %s298 = smul.addr %s297, 4
        %s299 = scalar_lea.vmem %s3, %s298
        %s300 = smul.u32 7, %s19
        %s301 = smul.u32 5, %s21
        %s302 = smul.u32 80, %s21
        %p303 = scmp.lt.s32.totalorder %s302, 399
        %s304 = scalar_select %p303, %s302, 399
        %p305 = scmp.lt.s32.totalorder %s20, 0
        %s306 = scalar_select %p305, %s20, 0
        %s307 = sadd.s32 %s306, %s304
        %s308 = smul.addr %s307, 4
        %s309 = scalar_lea.vmem %s1, %s308
        %s310 = smul.u32 80, %s21
        %p311 = scmp.lt.s32.totalorder %s20, 0
        %s312 = scalar_select %p311, %s20, 0
        %s313 = scalar_lea.vmem %s2, %s312
        %s314 = smul.u32 7, %s19
        %p315 = scmp.lt.s32.totalorder %s314, 13
        %s316 = scalar_select %p315, %s314, 13
        %p317 = scmp.lt.s32.totalorder %s20, 0
        %s318 = scalar_select %p317, %s20, 0
        %s319 = sadd.s32 %s318, %s316
        %s320 = smul.addr %s319, 4
        %s321 = scalar_lea.vmem %s3, %s320
        %s322 = smul.u32 7, %s19
        %p324 = scmp.eq.s32.totalorder %s21, 0
        // Predicated region
        $region59: #{patch_embed_event_tmp.1} parent=53 // pred_check
          %p325 = pneg %p324
        $region60: #{patch_embed_event_tmp.1} parent=53 // pred_check_branch
          %327 = sbr.rel (%p325) target = $region62
        $region61: #{patch_embed_event_tmp.1} parent=53 // pred_region
          %v328 = vld [vmem:[%s313] sm:$0x1]
          %v330 = vlaneseq
          %v331 = vshrl.u32 %v330, 7
          %v332 = vsub.s32 0, %v331
          %v333 = vrot.slane %v328, %v332
          %335 = vst [vmem:[#allocation2] sm:$0xff] %v333
          %336 = vst [vmem:[#allocation2 + $0x8] sm:$0xff] %v333
          %337 = vst [vmem:[#allocation2 + $0x10] sm:$0xff] %v333
          %338 = vst [vmem:[#allocation2 + $0x18] sm:$0xff] %v333
          %339 = vst [vmem:[#allocation2 + $0x20] sm:$0xff] %v333
          %340 = vst [vmem:[#allocation2 + $0x28] sm:$0xff] %v333
          %341 = vst [vmem:[#allocation2 + $0x30] sm:$0xff] %v333
        $region62: #{patch_embed_event_tmp.1} parent=53 // pred_fallthru
          _
        %v342 = vld [vmem:[#allocation2] sm:$0xff]
        %v343 = vld [vmem:[#allocation2 + $0x8] sm:$0xff]
        %v344 = vld [vmem:[#allocation2 + $0x10] sm:$0xff]
        %v345 = vld [vmem:[#allocation2 + $0x18] sm:$0xff]
        %v346 = vld [vmem:[#allocation2 + $0x20] sm:$0xff]
        %v347 = vld [vmem:[#allocation2 + $0x28] sm:$0xff]
        %v348 = vld [vmem:[#allocation2 + $0x30] sm:$0xff]
        %v349 = vld [vmem:[%s265] sm:$0xff]
        %v350 = vld [vmem:[%s265 + $0x8] sm:$0xff]
        %v351 = vld [vmem:[%s265 + $0x10] sm:$0xf]
        %v352 = vld [vmem:[%s265 + $0x14] sm:$0xff]
        %v353 = vld [vmem:[%s265 + $0x1c] sm:$0xff]
        %v354 = vld [vmem:[%s265 + $0x24] sm:$0xf]
        %v355 = vld [vmem:[%s265 + $0x28] sm:$0xff]
        %v356 = vld [vmem:[%s265 + $0x30] sm:$0xff]
        %v357 = vld [vmem:[%s265 + $0x38] sm:$0xf]
        %v358 = vld [vmem:[%s265 + $0x3c] sm:$0xff]
        %v359 = vld [vmem:[%s265 + $0x44] sm:$0xff]
        %v360 = vld [vmem:[%s265 + $0x4c] sm:$0xf]
        %v361 = vld [vmem:[%s265 + $0x50] sm:$0xff]
        %v362 = vld [vmem:[%s265 + $0x58] sm:$0xff]
        %v363 = vld [vmem:[%s265 + $0x60] sm:$0xf]
        %v364 = vld [vmem:[%s265 + $0x64] sm:$0xff]
        %v365 = vld [vmem:[%s265 + $0x6c] sm:$0xff]
        %v366 = vld [vmem:[%s265 + $0x74] sm:$0xf]
        %v367 = vld [vmem:[%s265 + $0x78] sm:$0xff]
        %v368 = vld [vmem:[%s265 + $0x80] sm:$0xff]
        %v369 = vld [vmem:[%s265 + $0x88] sm:$0xf]
        %v370 = vld [vmem:[%s309] sm:$0xf]
        %v371 = vld [vmem:[%s309 + $0x4] sm:$0xf]
        %v372 = vld [vmem:[%s309 + $0x8] sm:$0xf]
        %v373 = vld [vmem:[%s309 + $0xc] sm:$0xf]
        %v374 = vld [vmem:[%s309 + $0x10] sm:$0xf]
        %v375 = vld [vmem:[%s309 + $0x14] sm:$0xf]
        %v376 = vld [vmem:[%s309 + $0x18] sm:$0xf]
        %v377 = vld [vmem:[%s309 + $0x1c] sm:$0xf]
        %v378 = vld [vmem:[%s309 + $0x20] sm:$0xf]
        %v379 = vld [vmem:[%s309 + $0x24] sm:$0xf]
        %v380 = vld [vmem:[%s309 + $0x28] sm:$0xf]
        %v381 = vld [vmem:[%s309 + $0x2c] sm:$0xf]
        %v382 = vld [vmem:[%s309 + $0x30] sm:$0xf]
        %v383 = vld [vmem:[%s309 + $0x34] sm:$0xf]
        %v384 = vld [vmem:[%s309 + $0x38] sm:$0xf]
        %v385 = vld [vmem:[%s309 + $0x3c] sm:$0xf]
        %v386 = vld [vmem:[%s309 + $0x40] sm:$0xf]
        %v387 = vld [vmem:[%s309 + $0x44] sm:$0xf]
        %v388 = vld [vmem:[%s309 + $0x48] sm:$0xf]
        %v389 = vld [vmem:[%s309 + $0x4c] sm:$0xf]
        %v390 = vld [vmem:[%s309 + $0x50] sm:$0xf]
        %v391 = vld [vmem:[%s309 + $0x54] sm:$0xf]
        %v392 = vld [vmem:[%s309 + $0x58] sm:$0xf]
        %v393 = vld [vmem:[%s309 + $0x5c] sm:$0xf]
        %v394 = vld [vmem:[%s309 + $0x60] sm:$0xf]
        %v395 = vld [vmem:[%s309 + $0x64] sm:$0xf]
        %v396 = vld [vmem:[%s309 + $0x68] sm:$0xf]
        %v397 = vld [vmem:[%s309 + $0x6c] sm:$0xf]
        %v398 = vld [vmem:[%s309 + $0x70] sm:$0xf]
        %v399 = vld [vmem:[%s309 + $0x74] sm:$0xf]
        %v400 = vld [vmem:[%s309 + $0x78] sm:$0xf]
        %v401 = vld [vmem:[%s309 + $0x7c] sm:$0xf]
        %v402 = vld [vmem:[%s309 + $0x80] sm:$0xf]
        %v403 = vld [vmem:[%s309 + $0x84] sm:$0xf]
        %v404 = vld [vmem:[%s309 + $0x88] sm:$0xf]
        %v405 = vld [vmem:[%s309 + $0x8c] sm:$0xf]
        %v406 = vld [vmem:[%s309 + $0x90] sm:$0xf]
        %v407 = vld [vmem:[%s309 + $0x94] sm:$0xf]
        %v408 = vld [vmem:[%s309 + $0x98] sm:$0xf]
        %v409 = vld [vmem:[%s309 + $0x9c] sm:$0xf]
        %v410 = vld [vmem:[%s309 + $0xa0] sm:$0xf]
        %v411 = vld [vmem:[%s309 + $0xa4] sm:$0xf]
        %v412 = vld [vmem:[%s309 + $0xa8] sm:$0xf]
        %v413 = vld [vmem:[%s309 + $0xac] sm:$0xf]
        %v414 = vld [vmem:[%s309 + $0xb0] sm:$0xf]
        %v415 = vld [vmem:[%s309 + $0xb4] sm:$0xf]
        %v416 = vld [vmem:[%s309 + $0xb8] sm:$0xf]
        %v417 = vld [vmem:[%s309 + $0xbc] sm:$0xf]
        %v418 = vld [vmem:[%s309 + $0xc0] sm:$0xf]
        %v419 = vld [vmem:[%s309 + $0xc4] sm:$0xf]
        %v420 = vld [vmem:[%s309 + $0xc8] sm:$0xf]
        %v421 = vld [vmem:[%s309 + $0xcc] sm:$0xf]
        %v422 = vld [vmem:[%s309 + $0xd0] sm:$0xf]
        %v423 = vld [vmem:[%s309 + $0xd4] sm:$0xf]
        %v424 = vld [vmem:[%s309 + $0xd8] sm:$0xf]
        %v425 = vld [vmem:[%s309 + $0xdc] sm:$0xf]
        %v426 = vld [vmem:[%s309 + $0xe0] sm:$0xf]
        %v427 = vld [vmem:[%s309 + $0xe4] sm:$0xf]
        %v428 = vld [vmem:[%s309 + $0xe8] sm:$0xf]
        %v429 = vld [vmem:[%s309 + $0xec] sm:$0xf]
        %v430 = vld [vmem:[%s309 + $0xf0] sm:$0xf]
        %v431 = vld [vmem:[%s309 + $0xf4] sm:$0xf]
        %v432 = vld [vmem:[%s309 + $0xf8] sm:$0xf]
        %v433 = vld [vmem:[%s309 + $0xfc] sm:$0xf]
        %v434 = vld [vmem:[%s309 + $0x100] sm:$0xf]
        %v435 = vld [vmem:[%s309 + $0x104] sm:$0xf]
        %v436 = vld [vmem:[%s309 + $0x108] sm:$0xf]
        %v437 = vld [vmem:[%s309 + $0x10c] sm:$0xf]
        %v438 = vld [vmem:[%s309 + $0x110] sm:$0xf]
        %v439 = vld [vmem:[%s309 + $0x114] sm:$0xf]
        %v440 = vld [vmem:[%s309 + $0x118] sm:$0xf]
        %v441 = vld [vmem:[%s309 + $0x11c] sm:$0xf]
        %v442 = vld [vmem:[%s309 + $0x120] sm:$0xf]
        %v443 = vld [vmem:[%s309 + $0x124] sm:$0xf]
        %v444 = vld [vmem:[%s309 + $0x128] sm:$0xf]
        %v445 = vld [vmem:[%s309 + $0x12c] sm:$0xf]
        %v446 = vld [vmem:[%s309 + $0x130] sm:$0xf]
        %v447 = vld [vmem:[%s309 + $0x134] sm:$0xf]
        %v448 = vld [vmem:[%s309 + $0x138] sm:$0xf]
        %v449 = vld [vmem:[%s309 + $0x13c] sm:$0xf]
        %v471 = vunpack.c.l.b16 %v349
        %v472 = vunpack.c.h.b16 %v349
        %v473 = vunpack.c.l.b16 %v350
        %v474 = vunpack.c.h.b16 %v350
        %v475 = vunpack.c.l.b16 %v351
        %v476 = vunpack.c.l.b16 %v352
        %v477 = vunpack.c.h.b16 %v352
        %v478 = vunpack.c.l.b16 %v353
        %v479 = vunpack.c.h.b16 %v353
        %v480 = vunpack.c.l.b16 %v354
        %v481 = vunpack.c.l.b16 %v355
        %v482 = vunpack.c.h.b16 %v355
        %v483 = vunpack.c.l.b16 %v356
        %v484 = vunpack.c.h.b16 %v356
        %v485 = vunpack.c.l.b16 %v357
        %v486 = vunpack.c.l.b16 %v358
        %v487 = vunpack.c.h.b16 %v358
        %v488 = vunpack.c.l.b16 %v359
        %v489 = vunpack.c.h.b16 %v359
        %v490 = vunpack.c.l.b16 %v360
        %v491 = vunpack.c.l.b16 %v361
        %v492 = vunpack.c.h.b16 %v361
        %v493 = vunpack.c.l.b16 %v362
        %v494 = vunpack.c.h.b16 %v362
        %v495 = vunpack.c.l.b16 %v363
        %v496 = vunpack.c.l.b16 %v364
        %v497 = vunpack.c.h.b16 %v364
        %v498 = vunpack.c.l.b16 %v365
        %v499 = vunpack.c.h.b16 %v365
        %v500 = vunpack.c.l.b16 %v366
        %v501 = vunpack.c.l.b16 %v367
        %v502 = vunpack.c.h.b16 %v367
        %v503 = vunpack.c.l.b16 %v368
        %v504 = vunpack.c.h.b16 %v368
        %v505 = vunpack.c.l.b16 %v369
        %v506 = vpack.c.b16 %v476, %v471
        %v507 = vpack.c.b16 %v477, %v472
        %v508 = vpack.c.b16 %v478, %v473
        %v509 = vpack.c.b16 %v479, %v474
        %v510 = vpack.c.b16 %v480, %v475
        %v511 = vpack.c.b16 %v486, %v481
        %v512 = vpack.c.b16 %v487, %v482
        %v513 = vpack.c.b16 %v488, %v483
        %v514 = vpack.c.b16 %v489, %v484
        %v515 = vpack.c.b16 %v490, %v485
        %v516 = vpack.c.b16 %v496, %v491
        %v517 = vpack.c.b16 %v497, %v492
        %v518 = vpack.c.b16 %v498, %v493
        %v519 = vpack.c.b16 %v499, %v494
        %v520 = vpack.c.b16 %v500, %v495
        %v521 = vpack.c.b16 %v501, %v501
        %v522 = vpack.c.b16 %v502, %v502
        %v523 = vpack.c.b16 %v503, %v503
        %v524 = vpack.c.b16 %v504, %v504
        %v525 = vpack.c.b16 %v505, %v505
        %v626 = vunpack.c.l.b16 %v370
        %v627 = vunpack.c.l.b16 %v371
        %v628 = vunpack.c.l.b16 %v372
        %v629 = vunpack.c.l.b16 %v373
        %v630 = vunpack.c.l.b16 %v374
        %v631 = vunpack.c.l.b16 %v375
        %v632 = vunpack.c.l.b16 %v376
        %v633 = vunpack.c.l.b16 %v377
        %v634 = vunpack.c.l.b16 %v378
        %v635 = vunpack.c.l.b16 %v379
        %v636 = vunpack.c.l.b16 %v380
        %v637 = vunpack.c.l.b16 %v381
        %v638 = vunpack.c.l.b16 %v382
        %v639 = vunpack.c.l.b16 %v383
        %v640 = vunpack.c.l.b16 %v384
        %v641 = vunpack.c.l.b16 %v385
        %v642 = vunpack.c.l.b16 %v386
        %v643 = vunpack.c.l.b16 %v387
        %v644 = vunpack.c.l.b16 %v388
        %v645 = vunpack.c.l.b16 %v389
        %v646 = vunpack.c.l.b16 %v390
        %v647 = vunpack.c.l.b16 %v391
        %v648 = vunpack.c.l.b16 %v392
        %v649 = vunpack.c.l.b16 %v393
        %v650 = vunpack.c.l.b16 %v394
        %v651 = vunpack.c.l.b16 %v395
        %v652 = vunpack.c.l.b16 %v396
        %v653 = vunpack.c.l.b16 %v397
        %v654 = vunpack.c.l.b16 %v398
        %v655 = vunpack.c.l.b16 %v399
        %v656 = vunpack.c.l.b16 %v400
        %v657 = vunpack.c.l.b16 %v401
        %v658 = vunpack.c.l.b16 %v402
        %v659 = vunpack.c.l.b16 %v403
        %v660 = vunpack.c.l.b16 %v404
        %v661 = vunpack.c.l.b16 %v405
        %v662 = vunpack.c.l.b16 %v406
        %v663 = vunpack.c.l.b16 %v407
        %v664 = vunpack.c.l.b16 %v408
        %v665 = vunpack.c.l.b16 %v409
        %v666 = vunpack.c.l.b16 %v410
        %v667 = vunpack.c.l.b16 %v411
        %v668 = vunpack.c.l.b16 %v412
        %v669 = vunpack.c.l.b16 %v413
        %v670 = vunpack.c.l.b16 %v414
        %v671 = vunpack.c.l.b16 %v415
        %v672 = vunpack.c.l.b16 %v416
        %v673 = vunpack.c.l.b16 %v417
        %v674 = vunpack.c.l.b16 %v418
        %v675 = vunpack.c.l.b16 %v419
        %v676 = vunpack.c.l.b16 %v420
        %v677 = vunpack.c.l.b16 %v421
        %v678 = vunpack.c.l.b16 %v422
        %v679 = vunpack.c.l.b16 %v423
        %v680 = vunpack.c.l.b16 %v424
        %v681 = vunpack.c.l.b16 %v425
        %v682 = vunpack.c.l.b16 %v426
        %v683 = vunpack.c.l.b16 %v427
        %v684 = vunpack.c.l.b16 %v428
        %v685 = vunpack.c.l.b16 %v429
        %v686 = vunpack.c.l.b16 %v430
        %v687 = vunpack.c.l.b16 %v431
        %v688 = vunpack.c.l.b16 %v432
        %v689 = vunpack.c.l.b16 %v433
        %v690 = vunpack.c.l.b16 %v434
        %v691 = vunpack.c.l.b16 %v435
        %v692 = vunpack.c.l.b16 %v436
        %v693 = vunpack.c.l.b16 %v437
        %v694 = vunpack.c.l.b16 %v438
        %v695 = vunpack.c.l.b16 %v439
        %v696 = vunpack.c.l.b16 %v440
        %v697 = vunpack.c.l.b16 %v441
        %v698 = vunpack.c.l.b16 %v442
        %v699 = vunpack.c.l.b16 %v443
        %v700 = vunpack.c.l.b16 %v444
        %v701 = vunpack.c.l.b16 %v445
        %v702 = vunpack.c.l.b16 %v446
        %v703 = vunpack.c.l.b16 %v447
        %v704 = vunpack.c.l.b16 %v448
        %v705 = vunpack.c.l.b16 %v449
        %v706 = vpack.c.b16 %v627, %v626
        %v707 = vpack.c.b16 %v629, %v628
        %v708 = vpack.c.b16 %v631, %v630
        %v709 = vpack.c.b16 %v633, %v632
        %v710 = vpack.c.b16 %v635, %v634
        %v711 = vpack.c.b16 %v637, %v636
        %v712 = vpack.c.b16 %v639, %v638
        %v713 = vpack.c.b16 %v641, %v640
        %v714 = vpack.c.b16 %v643, %v642
        %v715 = vpack.c.b16 %v645, %v644
        %v716 = vpack.c.b16 %v647, %v646
        %v717 = vpack.c.b16 %v649, %v648
        %v718 = vpack.c.b16 %v651, %v650
        %v719 = vpack.c.b16 %v653, %v652
        %v720 = vpack.c.b16 %v655, %v654
        %v721 = vpack.c.b16 %v657, %v656
        %v722 = vpack.c.b16 %v659, %v658
        %v723 = vpack.c.b16 %v661, %v660
        %v724 = vpack.c.b16 %v663, %v662
        %v725 = vpack.c.b16 %v665, %v664
        %v726 = vpack.c.b16 %v667, %v666
        %v727 = vpack.c.b16 %v669, %v668
        %v728 = vpack.c.b16 %v671, %v670
        %v729 = vpack.c.b16 %v673, %v672
        %v730 = vpack.c.b16 %v675, %v674
        %v731 = vpack.c.b16 %v677, %v676
        %v732 = vpack.c.b16 %v679, %v678
        %v733 = vpack.c.b16 %v681, %v680
        %v734 = vpack.c.b16 %v683, %v682
        %v735 = vpack.c.b16 %v685, %v684
        %v736 = vpack.c.b16 %v687, %v686
        %v737 = vpack.c.b16 %v689, %v688
        %v738 = vpack.c.b16 %v691, %v690
        %v739 = vpack.c.b16 %v693, %v692
        %v740 = vpack.c.b16 %v695, %v694
        %v741 = vpack.c.b16 %v697, %v696
        %v742 = vpack.c.b16 %v699, %v698
        %v743 = vpack.c.b16 %v701, %v700
        %v744 = vpack.c.b16 %v703, %v702
        %v745 = vpack.c.b16 %v705, %v704
        %786 = vmatprep.subr.bf16.mxu0 0
        %787 = vmatpush1.bf16.msra.mxu0 %v713
        %788 = vmatprep.subr.bf16.mxu0 0
        %789 = vmatpush1.bf16.msra.mxu0 %v712
        %790 = vmatprep.subr.bf16.mxu0 0
        %791 = vmatpush1.bf16.msra.mxu0 %v711
        %792 = vmatprep.subr.bf16.mxu0 0
        %793 = vmatpush1.bf16.msra.mxu0 %v710
        %794 = vmatprep.subr.bf16.mxu0 0
        %795 = vmatpush1.bf16.msra.mxu0 %v709
        %796 = vmatprep.subr.bf16.mxu0 0
        %797 = vmatpush1.bf16.msra.mxu0 %v708
        %798 = vmatprep.subr.bf16.mxu0 0
        %799 = vmatpush1.bf16.msra.mxu0 %v707
        %800 = vmatprep.subr.bf16.mxu0 0
        %801 = vmatpush1.bf16.msra.mxu0 %v706
        %802 = vmatprep.subr.bf16.mxu0 0
        %803 = vmatpush2.bf16.msra.mxu0 %v721
        %804 = vmatprep.subr.bf16.mxu0 0
        %805 = vmatpush2.bf16.msra.mxu0 %v720
        %806 = vmatprep.subr.bf16.mxu0 0
        %807 = vmatpush2.bf16.msra.mxu0 %v719
        %808 = vmatprep.subr.bf16.mxu0 0
        %809 = vmatpush2.bf16.msra.mxu0 %v718
        %810 = vmatprep.subr.bf16.mxu0 0
        %811 = vmatpush2.bf16.msra.mxu0 %v717
        %812 = vmatprep.subr.bf16.mxu0 0
        %813 = vmatpush2.bf16.msra.mxu0 %v716
        %814 = vmatprep.subr.bf16.mxu0 0
        %815 = vmatpush2.bf16.msra.mxu0 %v715
        %816 = vmatprep.subr.bf16.mxu0 0
        %817 = vmatpush2.bf16.msra.mxu0 %v714
        %818 = vmatprep.mubr.bf16.mxu0 %v507
        %819 = vmatmul.mubr.bf16.gmra.mxu0 %v506
        %v820 = vpop.f32.mrf.mxu0
        %v821 = vadd.f32 0.0, %v820
        %v822 = vpop.f32.mrf.mxu0
        %v823 = vpop.f32.mrf.mxu0
        %v824 = vadd.f32 0.0, %v823
        %v825 = vpop.f32.mrf.mxu0
        %826 = vmatprep.mubr.bf16.mxu0 %v512
        %827 = vmatmul.mubr.bf16.gmra.mxu0 %v511
        %v828 = vpop.f32.mrf.mxu0
        %v829 = vadd.f32 0.0, %v828
        %v830 = vpop.f32.mrf.mxu0
        %v831 = vpop.f32.mrf.mxu0
        %v832 = vadd.f32 0.0, %v831
        %v833 = vpop.f32.mrf.mxu0
        %834 = vmatprep.mubr.bf16.mxu0 %v517
        %835 = vmatmul.mubr.bf16.gmra.mxu0 %v516
        %v836 = vpop.f32.mrf.mxu0
        %v837 = vadd.f32 0.0, %v836
        %v838 = vpop.f32.mrf.mxu0
        %v839 = vpop.f32.mrf.mxu0
        %v840 = vadd.f32 0.0, %v839
        %v841 = vpop.f32.mrf.mxu0
        %842 = vmatprep.mubr.bf16.mxu0 %v522
        %843 = vmatmul.mubr.bf16.gmra.mxu0 %v521
        %v844 = vpop.f32.mrf.mxu0
        %v845 = vadd.f32 0.0, %v844
        %v846 = vpop.f32.mrf.mxu0
        %v847 = vpop.f32.mrf.mxu0
        %v848 = vpop.f32.mrf.mxu0
        %849 = vdwg.mxu0
        %850 = vmatprep.subr.bf16.mxu0 0
        %851 = vmatpush1.bf16.msra.mxu0 %v729
        %852 = vmatprep.subr.bf16.mxu0 0
        %853 = vmatpush1.bf16.msra.mxu0 %v728
        %854 = vmatprep.subr.bf16.mxu0 0
        %855 = vmatpush1.bf16.msra.mxu0 %v727
        %856 = vmatprep.subr.bf16.mxu0 0
        %857 = vmatpush1.bf16.msra.mxu0 %v726
        %858 = vmatprep.subr.bf16.mxu0 0
        %859 = vmatpush1.bf16.msra.mxu0 %v725
        %860 = vmatprep.subr.bf16.mxu0 0
        %861 = vmatpush1.bf16.msra.mxu0 %v724
        %862 = vmatprep.subr.bf16.mxu0 0
        %863 = vmatpush1.bf16.msra.mxu0 %v723
        %864 = vmatprep.subr.bf16.mxu0 0
        %865 = vmatpush1.bf16.msra.mxu0 %v722
        %866 = vmatprep.subr.bf16.mxu0 0
        %867 = vmatpush2.bf16.msra.mxu0 %v737
        %868 = vmatprep.subr.bf16.mxu0 0
        %869 = vmatpush2.bf16.msra.mxu0 %v736
        %870 = vmatprep.subr.bf16.mxu0 0
        %871 = vmatpush2.bf16.msra.mxu0 %v735
        %872 = vmatprep.subr.bf16.mxu0 0
        %873 = vmatpush2.bf16.msra.mxu0 %v734
        %874 = vmatprep.subr.bf16.mxu0 0
        %875 = vmatpush2.bf16.msra.mxu0 %v733
        %876 = vmatprep.subr.bf16.mxu0 0
        %877 = vmatpush2.bf16.msra.mxu0 %v732
        %878 = vmatprep.subr.bf16.mxu0 0
        %879 = vmatpush2.bf16.msra.mxu0 %v731
        %880 = vmatprep.subr.bf16.mxu0 0
        %881 = vmatpush2.bf16.msra.mxu0 %v730
        %882 = vmatprep.mubr.bf16.mxu0 %v509
        %883 = vmatmul.mubr.bf16.gmra.mxu0 %v508
        %v884 = vpop.f32.mrf.mxu0
        %v885 = vadd.f32 %v821, %v884
        %v886 = vpop.f32.mrf.mxu0
        %v887 = vpop.f32.mrf.mxu0
        %v888 = vadd.f32 %v824, %v887
        %v889 = vpop.f32.mrf.mxu0
        %890 = vmatprep.mubr.bf16.mxu0 %v514
        %891 = vmatmul.mubr.bf16.gmra.mxu0 %v513
        %v892 = vpop.f32.mrf.mxu0
        %v893 = vadd.f32 %v829, %v892
        %v894 = vpop.f32.mrf.mxu0
        %v895 = vpop.f32.mrf.mxu0
        %v896 = vadd.f32 %v832, %v895
        %v897 = vpop.f32.mrf.mxu0
        %898 = vmatprep.mubr.bf16.mxu0 %v519
        %899 = vmatmul.mubr.bf16.gmra.mxu0 %v518
        %v900 = vpop.f32.mrf.mxu0
        %v901 = vadd.f32 %v837, %v900
        %v902 = vpop.f32.mrf.mxu0
        %v903 = vpop.f32.mrf.mxu0
        %v904 = vadd.f32 %v840, %v903
        %v905 = vpop.f32.mrf.mxu0
        %906 = vmatprep.mubr.bf16.mxu0 %v524
        %907 = vmatmul.mubr.bf16.gmra.mxu0 %v523
        %v908 = vpop.f32.mrf.mxu0
        %v909 = vadd.f32 %v845, %v908
        %v910 = vpop.f32.mrf.mxu0
        %v911 = vpop.f32.mrf.mxu0
        %v912 = vpop.f32.mrf.mxu0
        %913 = vdwg.mxu0
        %914 = vmatprep.subr.bf16.mxu0 0
        %915 = vmatpush1.bf16.msra.mxu0 %v745
        %916 = vmatprep.subr.bf16.mxu0 0
        %917 = vmatpush1.bf16.msra.mxu0 %v744
        %918 = vmatprep.subr.bf16.mxu0 0
        %919 = vmatpush1.bf16.msra.mxu0 %v743
        %920 = vmatprep.subr.bf16.mxu0 0
        %921 = vmatpush1.bf16.msra.mxu0 %v742
        %922 = vmatprep.subr.bf16.mxu0 0
        %923 = vmatpush1.bf16.msra.mxu0 %v741
        %924 = vmatprep.subr.bf16.mxu0 0
        %925 = vmatpush1.bf16.msra.mxu0 %v740
        %926 = vmatprep.subr.bf16.mxu0 0
        %927 = vmatpush1.bf16.msra.mxu0 %v739
        %928 = vmatprep.subr.bf16.mxu0 0
        %929 = vmatpush1.bf16.msra.mxu0 %v738
        %930 = vmatprep.subr.bf16.mxu0 0
        %931 = vmatpush2.bf16.msra.mxu0 0
        %932 = vmatprep.subr.bf16.mxu0 0
        %933 = vmatpush2.bf16.msra.mxu0 0
        %934 = vmatprep.subr.bf16.mxu0 0
        %935 = vmatpush2.bf16.msra.mxu0 0
        %936 = vmatprep.subr.bf16.mxu0 0
        %937 = vmatpush2.bf16.msra.mxu0 0
        %938 = vmatprep.subr.bf16.mxu0 0
        %939 = vmatpush2.bf16.msra.mxu0 0
        %940 = vmatprep.subr.bf16.mxu0 0
        %941 = vmatpush2.bf16.msra.mxu0 0
        %942 = vmatprep.subr.bf16.mxu0 0
        %943 = vmatpush2.bf16.msra.mxu0 0
        %944 = vmatprep.subr.bf16.mxu0 0
        %945 = vmatpush2.bf16.msra.mxu0 0
        %946 = vmatprep.mubr.bf16.mxu0 0
        %947 = vmatmul.mubr.bf16.gmra.mxu0 %v510
        %v948 = vpop.f32.mrf.mxu0
        %v949 = vadd.f32 %v885, %v948
        %v950 = vpop.f32.mrf.mxu0
        %v951 = vpop.f32.mrf.mxu0
        %v952 = vadd.f32 %v888, %v951
        %v953 = vpop.f32.mrf.mxu0
        %954 = vmatprep.mubr.bf16.mxu0 0
        %955 = vmatmul.mubr.bf16.gmra.mxu0 %v515
        %v956 = vpop.f32.mrf.mxu0
        %v957 = vadd.f32 %v893, %v956
        %v958 = vpop.f32.mrf.mxu0
        %v959 = vpop.f32.mrf.mxu0
        %v960 = vadd.f32 %v896, %v959
        %v961 = vpop.f32.mrf.mxu0
        %962 = vmatprep.mubr.bf16.mxu0 0
        %963 = vmatmul.mubr.bf16.gmra.mxu0 %v520
        %v964 = vpop.f32.mrf.mxu0
        %v965 = vadd.f32 %v901, %v964
        %v966 = vpop.f32.mrf.mxu0
        %v967 = vpop.f32.mrf.mxu0
        %v968 = vadd.f32 %v904, %v967
        %v969 = vpop.f32.mrf.mxu0
        %970 = vmatprep.mubr.bf16.mxu0 0
        %971 = vmatmul.mubr.bf16.gmra.mxu0 %v525
        %v972 = vpop.f32.mrf.mxu0
        %v973 = vadd.f32 %v909, %v972
        %v974 = vpop.f32.mrf.mxu0
        %v975 = vpop.f32.mrf.mxu0
        %v976 = vpop.f32.mrf.mxu0
        %977 = vdwg.mxu0
        %v978 = vadd.f32 %v342, %v949
        %v979 = vadd.f32 %v343, %v952
        %v980 = vadd.f32 %v344, %v957
        %v981 = vadd.f32 %v345, %v960
        %v982 = vadd.f32 %v346, %v965
        %v983 = vadd.f32 %v347, %v968
        %v984 = vadd.f32 %v348, %v973
        %985 = vst [vmem:[#allocation2] sm:$0xff] %v978
        %986 = vst [vmem:[#allocation2 + $0x8] sm:$0xff] %v979
        %987 = vst [vmem:[#allocation2 + $0x10] sm:$0xff] %v980
        %988 = vst [vmem:[#allocation2 + $0x18] sm:$0xff] %v981
        %989 = vst [vmem:[#allocation2 + $0x20] sm:$0xff] %v982
        %990 = vst [vmem:[#allocation2 + $0x28] sm:$0xff] %v983
        %991 = vst [vmem:[#allocation2 + $0x30] sm:$0xff] %v984
        %p992 = scmp.eq.s32.totalorder %s21, 4
        // Predicated region
        $region63: #{patch_embed_event_tmp.1} parent=53 // pred_check
          %p993 = pneg %p992
        $region64: #{patch_embed_event_tmp.1} parent=53 // pred_check_branch
          %995 = sbr.rel (%p993) target = $region66
        $region65: #{patch_embed_event_tmp.1} parent=53 // pred_region
          %v996 = vld [vmem:[#allocation2] sm:$0xff]
          %v997 = vld [vmem:[#allocation2 + $0x8] sm:$0xff]
          %v998 = vld [vmem:[#allocation2 + $0x10] sm:$0xff]
          %v999 = vld [vmem:[#allocation2 + $0x18] sm:$0xff]
          %v1000 = vld [vmem:[#allocation2 + $0x20] sm:$0xff]
          %v1001 = vld [vmem:[#allocation2 + $0x28] sm:$0xff]
          %v1002 = vld [vmem:[#allocation2 + $0x30] sm:$0xff]
          %v1003 = vpack.c.bf16 %v997, %v996
          %v1004 = vpack.c.bf16 %v999, %v998
          %v1005 = vpack.c.bf16 %v1001, %v1000
          %v1006 = vpack.c.bf16 %v1002, %v1002
          %v1011 = vunpack.c.l.b16 %v1003
          %v1012 = vunpack.c.h.b16 %v1003
          %v1013 = vunpack.c.l.b16 %v1004
          %v1014 = vunpack.c.h.b16 %v1004
          %v1015 = vunpack.c.l.b16 %v1005
          %v1016 = vunpack.c.h.b16 %v1005
          %v1017 = vunpack.c.l.b16 %v1006
          %v1018 = vpack.c.b16 %v1011, %v1011
          %v1019 = vpack.c.b16 %v1012, %v1012
          %v1020 = vpack.c.b16 %v1013, %v1013
          %v1021 = vpack.c.b16 %v1014, %v1014
          %v1022 = vpack.c.b16 %v1015, %v1015
          %v1023 = vpack.c.b16 %v1016, %v1016
          %v1024 = vpack.c.b16 %v1017, %v1017
          %1032 = vst [vmem:[%s321] sm:$0xf] %v1018
          %1033 = vst [vmem:[%s321 + $0x4] sm:$0xf] %v1019
          %1034 = vst [vmem:[%s321 + $0x8] sm:$0xf] %v1020
          %1035 = vst [vmem:[%s321 + $0xc] sm:$0xf] %v1021
          %1036 = vst [vmem:[%s321 + $0x10] sm:$0xf] %v1022
          %1037 = vst [vmem:[%s321 + $0x14] sm:$0xf] %v1023
          %1038 = vst [vmem:[%s321 + $0x18] sm:$0xf] %v1024
        $region66: #{patch_embed_event_tmp.1} parent=53 // pred_fallthru
          _
        %s1039 = smul.u32 7, %s19
        %p1040 = scmp.lt.s32.totalorder %s1039, 13
        %s1041 = scalar_select %p1040, %s1039, 13
        %p1042 = scmp.lt.s32.totalorder %s20, 0
        %s1043 = scalar_select %p1042, %s20, 0
        %s1044 = sadd.s32 %s1043, %s1041
        %s1045 = smul.addr %s1044, 4
        %s1046 = scalar_lea.vmem %s3, %s1045
        // Predicated region
        $region67: #{patch_embed_event_tmp.1} parent=53 // pred_check
          %p1047 = pneg %p135
        $region68: #{patch_embed_event_tmp.1} parent=53 // pred_check_branch
          %1049 = sbr.rel (%p1047) target = $region70
        $region69: #{patch_embed_event_tmp.1} parent=53 // pred_region
          %s1050 = smul.u32 7, %s19
        $region70: #{patch_embed_event_tmp.1} parent=53 // pred_fallthru
          _
      $region54: #{patch_embed_event_tmp.1} parent=5 // pred_fallthru
        _
      %p1051 = scmp.le.s32.totalorder 2, %s9
      // Predicated region
      $region71: #{patch_embed_event_tmp.1} parent=5 // pred_check
        %p1052 = pneg %p1051
      $region72: #{patch_embed_event_tmp.1} parent=5 // pred_check_branch
        %1054 = sbr.rel (%p1052) target = $region74
      $region73: #{patch_embed_event_tmp.1} parent=5 // pred_region
        %s1055 = ssub.s32 %s9, 2
        // Predicated region
        $region75: #{patch_embed_event_tmp.1} parent=73 // pred_check
          %p1056 = pneg %p141
        $region76: #{patch_embed_event_tmp.1} parent=73 // pred_check_branch
          %1058 = sbr.rel (%p1056) target = $region78
        $region77: #{patch_embed_event_tmp.1} parent=73 // pred_region
          %s1059 = smul.u32 7, %s22
          %p1060 = scmp.lt.s32.totalorder %s1059, 13
          %s1061 = scalar_select %p1060, %s1059, 13
          %p1062 = scmp.lt.s32.totalorder %s23, 0
          %s1063 = scalar_select %p1062, %s23, 0
          %s1064 = sadd.s32 %s1063, %s1061
          %s1065 = smul.addr %s1064, 4
          %s1066 = scalar_lea.vmem %s3, %s1065
        $region78: #{patch_embed_event_tmp.1} parent=73 // pred_fallthru
          _
      $region74: #{patch_embed_event_tmp.1} parent=5 // pred_fallthru
        _
    $region6: #{patch_embed_event_tmp.1} parent=1 // loop_footer
      %s13 = sadd.s32 1, %s9
    $region7: #{patch_embed_event_tmp.1} parent=1 // loop_footer_branch
      %8 = sbr.rel target = $region3
    $region8: #{patch_embed_event_tmp.1} parent=1 // loop_exit
      _

</llo_original>
